<compile_context>
chip_gen: v7x
topology: tpu7x:2x2x1
jax: 0.10.0
libtpu: 0.0.40
codegen_flags: <defaults>
</compile_context>

<pallas_src>
import functools

import jax
import jax.numpy as jnp
from jax import lax
from jax.experimental import pallas as pl
from jax.experimental.pallas import tpu as pltpu

_LANES = 128
_SUBLANES = 8
_MAX_TOKENS_PER_TILE = 512               # tokens gathered per grid step
_TABLE_VMEM_BUDGET = 16 * 1024 * 1024    # resident-table cap (v7x-safe)


def _round_up(x: int, m: int) -> int:
    return ((x + m - 1) // m) * m


def _gather_kernel(idx_ref, table_ref, out_ref, *, tokens_per_tile, pack, dim):
    """One grid step: gather `tokens_per_tile` embedding rows from the
    VMEM-resident table into a lane-dense (tokens_per_tile // pack, pack*dim)
    output tile.  idx_ref is the flat index array in SMEM (scalar prefetch)."""
    base = pl.program_id(0) * tokens_per_tile
    rows_per_tile = tokens_per_tile // pack

    def body(r, carry):
        tok0 = base + r * pack
        for j in range(pack):                              # static unroll
            row = table_ref[pl.ds(idx_ref[tok0 + j], 1), :]     # (1, D) from VMEM
            out_ref[pl.ds(r, 1), pl.ds(j * dim, dim)] = row
        return carry

    lax.fori_loop(0, rows_per_tile, body, 0)


def positional_encodings(input_text: jax.Array, table: jax.Array) -> jax.Array:
    """Pallas equivalent of PositionalEncodings.forward (embedding lookup)."""
    B, S = input_text.shape
    L, D = table.shape
    N = B * S

    # Clamp instead of raising on out-of-range positions (torch would raise).
    idx_flat = jnp.clip(input_text.reshape(N).astype(jnp.int32), 0, L - 1)

    if L * D * table.dtype.itemsize > _TABLE_VMEM_BUDGET:
        # TODO(synk): blocked-table / manual-DMA gather path for tables too big
        # to stay VMEM-resident; fall back to XLA's gather for now.
        return jnp.take(table, idx_flat, axis=0).reshape(B, S, D)

    # Pack P tokens per 128-lane output row when D divides 128 (lane-dense
    # out_spec); otherwise emit (TN, D) rows directly (D == full dim is legal).
    pack = _LANES // D if (D < _LANES and _LANES % D == 0) else 1
    align = _SUBLANES * pack
    tokens_per_tile = min(_MAX_TOKENS_PER_TILE, _round_up(N, align))
    tokens_per_tile = _round_up(tokens_per_tile, align)
    num_tiles = pl.cdiv(N, tokens_per_tile)
    n_pad = num_tiles * tokens_per_tile
    rows_per_tile = tokens_per_tile // pack

    idx_pad = jnp.pad(idx_flat, (0, n_pad - N))   # padded tokens read row 0

    kernel = functools.partial(
        _gather_kernel, tokens_per_tile=tokens_per_tile, pack=pack, dim=D)

    out_packed = pl.pallas_call(
        kernel,
        out_shape=jax.ShapeDtypeStruct((n_pad // pack, pack * D), table.dtype),
        grid_spec=pltpu.PrefetchScalarGridSpec(
            num_scalar_prefetch=1,                  # flat indices -> SMEM
            grid=(num_tiles,),
            in_specs=[
                # Full table, constant block index -> fetched once, VMEM-resident.
                pl.BlockSpec((L, D), lambda i, idx: (0, 0)),
            ],
            out_specs=pl.BlockSpec((rows_per_tile, pack * D),
                                   lambda i, idx: (i, 0)),
        ),
        compiler_params=pltpu.CompilerParams(
            dimension_semantics=("parallel",),      # independent token tiles
            vmem_limit_bytes=32 * 1024 * 1024,
        ),
    )(idx_pad, table)

    # (n_pad // P, P*D) and (n_pad, D) share a row-major layout -> free reshape.
    return out_packed.reshape(n_pad, D)[:N].reshape(B, S, D)


if __name__ == "__main__":
    # Module hyper-params (small, consistent with the nn.Module __init__)
    max_sequence_length = 16   # L
    embedding_dimension = 32   # D
    batch = 2                  # B
    seq = 8                    # S

    key = jax.random.PRNGKey(0)
    k_tab, k_idx = jax.random.split(key)

    # Deterministic "nn.Embedding.weight" init (N(0,1), like torch default)
    table = jax.random.normal(
        k_tab, (max_sequence_length, embedding_dimension), dtype=jnp.float32)
    # Integer token positions in [0, L)
    input_text = jax.random.randint(
        k_idx, (batch, seq), 0, max_sequence_length, dtype=jnp.int32)

    out = positional_encodings(input_text, table)
    out = jax.block_until_ready(out)

    # Silent correctness check against plain-JAX embedding lookup
    ref = jnp.take(table, input_text, axis=0)
    assert out.shape == (batch, seq, embedding_dimension)
    assert jnp.allclose(out, ref, atol=1e-6), "mismatch vs reference gather"

    print("KERNEL_OK")
</pallas_src>

<mosaic_0001>
module attributes {stable_mosaic.version = 11 : i64} {
  func.func @_gather_kernel(%arg0: i32, %arg1: memref<32xi32, #tpu.memory_space<smem>>, %arg2: memref<16x32xf32, #tpu.memory_space<vmem>>, %arg3: memref<8x128xf32, #tpu.memory_space<vmem>>) attributes {dimension_semantics = [#tpu.dimension_semantics<parallel>], iteration_bounds = array<i64: 1>, scalar_prefetch = 1 : i64, scratch_operands = 0 : i64, tpu.core_type = #tpu.core_type<tc>, window_params = [{pipeline_mode = #tpu.pipeline_mode<synchronous>, transform_indices = @transform_0, window_bounds = array<i64: 16, 32>}, {transform_indices = @transform_1, window_bounds = array<i64: 8, 128>}]} {
    %c32_i32 = arith.constant 32 : i32
    %0 = arith.muli %arg0, %c32_i32 : i32
    %c0_i32 = arith.constant 0 : i32
    %c8_i32 = arith.constant 8 : i32
    %1 = arith.addi %c0_i32, %c8_i32 : i32
    %c1_i32 = arith.constant 1 : i32
    scf.for %arg4 = %c0_i32 to %1 step %c1_i32  : i32 {
      %c4_i32 = arith.constant 4 : i32
      %2 = arith.muli %arg4, %c4_i32 : i32
      %3 = arith.addi %0, %2 : i32
      %c0_i32_1 = arith.constant 0 : i32
      %4 = arith.addi %3, %c0_i32_1 : i32
      %5 = arith.index_cast %4 : i32 to index
      %6 = memref.load %arg1[%5] : memref<32xi32, #tpu.memory_space<smem>>
      %7 = arith.index_cast %6 : i32 to index
      %c0 = arith.constant 0 : index
      %8 = vector.load %arg2[%7, %c0] : memref<16x32xf32, #tpu.memory_space<vmem>>, vector<1x32xf32>
      %9 = arith.index_cast %arg4 : i32 to index
      %c0_2 = arith.constant 0 : index
      %10 = vector.load %arg3[%9, %c0_2] : memref<8x128xf32, #tpu.memory_space<vmem>>, vector<1x32xf32>
      tpu.vector_store %arg3[%9, %c0_2], %8 {strides = array<i32>} : memref<8x128xf32, #tpu.memory_space<vmem>>, vector<1x32xf32>,
      %c1_i32_3 = arith.constant 1 : i32
      %11 = arith.addi %3, %c1_i32_3 : i32
      %12 = arith.index_cast %11 : i32 to index
      %13 = memref.load %arg1[%12] : memref<32xi32, #tpu.memory_space<smem>>
      %14 = arith.index_cast %13 : i32 to index
      %c0_4 = arith.constant 0 : index
      %15 = vector.load %arg2[%14, %c0_4] : memref<16x32xf32, #tpu.memory_space<vmem>>, vector<1x32xf32>
      %16 = arith.index_cast %arg4 : i32 to index
      %c32 = arith.constant 32 : index
      %17 = vector.load %arg3[%16, %c32] : memref<8x128xf32, #tpu.memory_space<vmem>>, vector<1x32xf32>
      tpu.vector_store %arg3[%16, %c32], %15 {strides = array<i32>} : memref<8x128xf32, #tpu.memory_space<vmem>>, vector<1x32xf32>,
      %c2_i32 = arith.constant 2 : i32
      %18 = arith.addi %3, %c2_i32 : i32
      %19 = arith.index_cast %18 : i32 to index
      %20 = memref.load %arg1[%19] : memref<32xi32, #tpu.memory_space<smem>>
      %21 = arith.index_cast %20 : i32 to index
      %c0_5 = arith.constant 0 : index
      %22 = vector.load %arg2[%21, %c0_5] : memref<16x32xf32, #tpu.memory_space<vmem>>, vector<1x32xf32>
      %23 = arith.index_cast %arg4 : i32 to index
      %c64 = arith.constant 64 : index
      %24 = vector.load %arg3[%23, %c64] : memref<8x128xf32, #tpu.memory_space<vmem>>, vector<1x32xf32>
      tpu.vector_store %arg3[%23, %c64], %22 {strides = array<i32>} : memref<8x128xf32, #tpu.memory_space<vmem>>, vector<1x32xf32>,
      %c3_i32 = arith.constant 3 : i32
      %25 = arith.addi %3, %c3_i32 : i32
      %26 = arith.index_cast %25 : i32 to index
      %27 = memref.load %arg1[%26] : memref<32xi32, #tpu.memory_space<smem>>
      %28 = arith.index_cast %27 : i32 to index
      %c0_6 = arith.constant 0 : index
      %29 = vector.load %arg2[%28, %c0_6] : memref<16x32xf32, #tpu.memory_space<vmem>>, vector<1x32xf32>
      %30 = arith.index_cast %arg4 : i32 to index
      %c96 = arith.constant 96 : index
      %31 = vector.load %arg3[%30, %c96] : memref<8x128xf32, #tpu.memory_space<vmem>>, vector<1x32xf32>
      tpu.vector_store %arg3[%30, %c96], %29 {strides = array<i32>} : memref<8x128xf32, #tpu.memory_space<vmem>>, vector<1x32xf32>,
    }
    %c8_i32_0 = arith.constant 8 : i32
    return
  }
  func.func @transform_0(%arg0: i32, %arg1: memref<32xi32, #tpu.memory_space<smem>>) -> (i32, i32) {
    %c0_i32 = arith.constant 0 : i32
    %c0_i32_0 = arith.constant 0 : i32
    %c0_i32_1 = arith.constant 0 : i32
    return %c0_i32, %c0_i32_0 : i32, i32
  }
  func.func @transform_1(%arg0: i32, %arg1: memref<32xi32, #tpu.memory_space<smem>>) -> (i32, i32) {
    %c0_i32 = arith.constant 0 : i32
    %c0_i32_0 = arith.constant 0 : i32
    return %arg0, %c0_i32 : i32, i32
  }
}

</mosaic_0001>

<llo_original>
// kernel: tpu_custom_call.1
$region0: #{tpu_custom_call.1}
  #allocation0 [shape = 'u32[]', space=smem, size = 0x4, offset = 0x4, fixed_abs, tag = 'smem constant byte address 0x4 - core index']
  #allocation1 [shape = 'u32[144,128]{1,0:T(1,128)}', space=vmem, size = 0x12000, scoped, tag = 'internal scratch']
  #allocation2 [shape = 's32[1]{0}', space=sflag, size = 0x4, scoped, tag = 'scoped memory for tpu_custom_call.1']
  #allocation3 [shape = 'u8[512]{0}', space=smem, size = 0x200, scoped, tag = 'prefetched SMEM operand 0']
  %s0 = inlined_call_operand.hbm [shape: s32[32], index: 0, kind: input, shape index: {}]
  %s1 = inlined_call_operand.hbm [shape: f32[16,32], index: 1, kind: input, shape index: {}]
  %s2 = inlined_call_operand.hbm [shape: f32[8,128], index: 2, kind: output, shape index: {}]
  %s3 = sld [smem:[#allocation0]]
  $region25: #{tpu_custom_call.1} parent=0
    _
  %s5 = ssub.s32 1, %s3
  %s6 = scalar_select 0, %s5, %s3
  %8 = dma.hbm_to_smem %s0, 16, [#allocation3], [#allocation2]
  %9 = dma.done [#allocation2], 16
  %10 = sfence
  $region1: #{tpu_custom_call.1} parent=0
    #allocation4 [shape = 'u8[8192]{0}', space=vmem, size = 0x2000, scoped, tag = 'input window, operand 1, single buffered']
    #allocation5 [shape = 's32[1]{0}', space=sflag, size = 0x4, scoped, tag = 'scoped memory for tpu_custom_call.1']
    #allocation6 [shape = 's32[1]{0}', space=sflag, size = 0x4, scoped, tag = 'scoped memory for tpu_custom_call.1']
    #allocation7 [shape = 'u8[4096]{0}', space=vmem, size = 0x1000, scoped, tag = 'output window, operand 0, single buffered']
    %11 = vsyncpa [#allocation5], 0
    %12 = vsyncpa [#allocation6], 0
    // Predicated region
    $region2: #{tpu_custom_call.1} parent=1 // pred_check
      _
    $region3: #{tpu_custom_call.1} parent=1 // pred_check_branch
      %14 = sbr.rel (0) target = $region5
    $region4: #{tpu_custom_call.1} parent=1 // pred_region
      %s16 = ssub.s32 256, 256
      %17 = vsyncadd [#allocation5], %s16
      %s18 = sshll.u32 [#allocation4], 4
      %s19 = int_to_ptr.vmem [resolvable:$true] %s18
      %24 = dma.hbm_to_vmem [thread:$0]  %s1, 256, %s19, [#allocation5], 128, 128, 8
    $region5: #{tpu_custom_call.1} parent=1 // pred_fallthru
      _
    // Predicated region
    $region6: #{tpu_custom_call.1} parent=1 // pred_check
      _
    $region7: #{tpu_custom_call.1} parent=1 // pred_check_branch
      %26 = sbr.rel (0) target = $region9
    $region8: #{tpu_custom_call.1} parent=1 // pred_region
      %27 = dma.done [#allocation5], 256
    $region9: #{tpu_custom_call.1} parent=1 // pred_fallthru
      _
    %s28 = smul.u32 0, 32
    loop: start=0, step=1, limit=8
    $region10: #{tpu_custom_call.1} parent=1 // loop_pre_header
      _
    $region11: #{tpu_custom_call.1} parent=1 // loop_header
      %s30 = sphi 0, %s34
      %p31 = scmp.ge.s32.totalorder %s30, 8
    $region12: #{tpu_custom_call.1} parent=1 // loop_header_branch
      %33 = sbr.rel (%p31) target = $region16
    $region13: #{tpu_custom_call.1} parent=1 // loop_body
      %s35 = smul.u32 %s30, 4
      %s36 = sadd.s32 %s28, %s35
      %s37 = sld [smem:[#allocation3 + %s36]]
      %s38 = scalar_lea.vmem [#allocation4], %s37
      %v39 = vld [vmem:[%s38] sm:$0x1]
      %s40 = scalar_lea.vmem [#allocation7], %s30
      %vm41 = vcmask 253952
      %42 = vst.msk [vmem:[%s40] sm:$0x1] %vm41, %v39
      %s43 = sadd.s32 %s36, 1
      %s44 = sld [smem:[#allocation3 + %s43]]
      %s45 = scalar_lea.vmem [#allocation4], %s44
      %v46 = vld [vmem:[%s45] sm:$0x1]
      %48 = vrot.lane.b32.xlu0 %v46, 32
      %v49 = vpop.permute.xlu0 %48
      %vm51 = vcmask 516352
      %52 = vst.msk [vmem:[%s40] sm:$0x1] %vm51, %v49
      %s53 = sadd.s32 %s36, 2
      %s54 = sld [smem:[#allocation3 + %s53]]
      %s55 = scalar_lea.vmem [#allocation4], %s54
      %v56 = vld [vmem:[%s55] sm:$0x1]
      %58 = vrot.lane.b32.xlu0 %v56, 64
      %v59 = vpop.permute.xlu0 %58
      %vm61 = vcmask 778752
      %62 = vst.msk [vmem:[%s40] sm:$0x1] %vm61, %v59
      %s63 = sadd.s32 %s36, 3
      %s64 = sld [smem:[#allocation3 + %s63]]
      %s65 = scalar_lea.vmem [#allocation4], %s64
      %v66 = vld [vmem:[%s65] sm:$0x1]
      %68 = vrot.lane.b32.xlu0 %v66, 96
      %v69 = vpop.permute.xlu0 %68
      %vm71 = vcmask 1041152
      %72 = vst.msk [vmem:[%s40] sm:$0x1] %vm71, %v69
    $region14: #{tpu_custom_call.1} parent=1 // loop_footer
      %s34 = sadd.s32 1, %s30
    $region15: #{tpu_custom_call.1} parent=1 // loop_footer_branch
      %29 = sbr.rel target = $region11
    $region16: #{tpu_custom_call.1} parent=1 // loop_exit
      _
    // Predicated region
    $region17: #{tpu_custom_call.1} parent=1 // pred_check
      _
    $region18: #{tpu_custom_call.1} parent=1 // pred_check_branch
      %74 = sbr.rel (0) target = $region20
    $region19: #{tpu_custom_call.1} parent=1 // pred_region
      %s76 = ssub.s32 128, 128
      %77 = vsyncadd [#allocation6], %s76
      %s79 = sshll.u32 [#allocation7], 4
      %s80 = int_to_ptr.vmem [resolvable:$true] %s79
      %82 = dma.vmem_to_hbm [thread:$0]  %s80, 128, %s2, [#allocation6]
    $region20: #{tpu_custom_call.1} parent=1 // pred_fallthru
      _
    // Predicated region
    $region21: #{tpu_custom_call.1} parent=1 // pred_check
      _
    $region22: #{tpu_custom_call.1} parent=1 // pred_check_branch
      %84 = sbr.rel (0) target = $region24
    $region23: #{tpu_custom_call.1} parent=1 // pred_region
      %85 = dma.done [#allocation6], 128
    $region24: #{tpu_custom_call.1} parent=1 // pred_fallthru
      _
    %86 = vsyncpa [#allocation5], 1
    %87 = vsyncpa [#allocation6], 1

</llo_original>
